<compile_context>
chip_gen: v5e
topology: v5e:2x2
jax: 0.10.0
libtpu: 0.0.40
codegen_flags: <defaults>
</compile_context>

<pallas_src>
import jax
import jax.numpy as jnp
from jax.experimental import pallas as pl
from jax.experimental.pallas import tpu as pltpu

_LANE = 128
_SUBLANE = 8
_LEAKY_SLOPE = 0.1


def _round_up(n, m):
    return ((n + m - 1) // m) * m


def _leaky_relu(x, slope=_LEAKY_SLOPE):
    # For 0 < slope < 1: max(x, slope*x) == LeakyReLU(x); mul+max beats cmp+select.
    return jnp.maximum(x, slope * x)


def tactile_decoder_kernel(
    x_ref,
    w1_ref, b1_ref,
    w2_ref, b2_ref,
    w3_ref, b3_ref,
    w4_ref, b4_ref,
    w5_ref, b5_ref,
    o_ref,
):
    """Fused 5-layer MLP: bf16 MXU matmuls with f32 accumulation, bias + LeakyReLU on VPU."""
    h = x_ref[...]  # (TB, D_in_pad) bf16

    def layer(h, w_ref, b_ref, activate):
        y = jnp.dot(h.astype(jnp.bfloat16), w_ref[...],
                    preferred_element_type=jnp.float32) + b_ref[...]
        return _leaky_relu(y) if activate else y

    h = layer(h, w1_ref, b1_ref, True)   # Dropout(0.5) -> identity (eval)
    h = layer(h, w2_ref, b2_ref, True)   # Dropout(0.2) -> identity (eval)
    h = layer(h, w3_ref, b3_ref, True)   # Dropout(0.5) -> identity (eval)
    h = layer(h, w4_ref, b4_ref, True)
    h = layer(h, w5_ref, b5_ref, False)

    o_ref[...] = h.astype(o_ref.dtype)


def init_params(key, z_dim=128, num_img=12, dtype=jnp.float32):
    """Deterministic synthetic params; shapes follow TactileDecoder.__init__ (num_img=12)."""
    dims = [
        (int(2 * z_dim), int(1.5 * z_dim)),
        (int(1.5 * z_dim), int(1.25 * z_dim)),
        (int(1.25 * z_dim), z_dim),
        (z_dim, int(0.75 * z_dim)),
        (int(0.75 * z_dim), 3 * num_img),
    ]
    params = []
    for (fin, fout) in dims:
        kw, kb, key = jax.random.split(key, 3)
        scale = jnp.sqrt(2.0 / fin).astype(dtype)  # kaiming-ish deterministic init
        w = jax.random.normal(kw, (fin, fout), dtype) * scale
        b = jax.random.normal(kb, (1, fout), dtype) * 0.01
        params.append((w, b))
    return params


@jax.jit
def tactile_decoder_forward(img_encoded, params):
    """img_encoded: (B, 2, z_dim) float32  ->  (B, 3*num_img) float32."""
    B = img_encoded.shape[0]
    x = img_encoded.reshape(B, -1)  # nn.Flatten()
    d_in = x.shape[1]
    out_dim = params[-1][0].shape[1]

    # --- pad to TPU-friendly shapes --------------------------------------------------
    # batch -> multiple of the batch tile; every feature dim -> multiple of 128 lanes
    # (lane-dense loads/stores, full MXU columns).
    if B >= 256:
        tb = 256
    elif B >= 128:
        tb = 128
    else:
        tb = _round_up(max(B, 1), _SUBLANE)
    b_pad = _round_up(max(B, 1), tb)
    d_in_pad = _round_up(d_in, _LANE)

    # Input handed to the kernel in bf16 (halves activation HBM traffic); zero padding
    # is exact and LeakyReLU(0) = 0, so padded rows/cols stay zero through every layer.
    x_pad = jnp.zeros((b_pad, d_in_pad), jnp.bfloat16).at[:B, :d_in].set(
        x.astype(jnp.bfloat16))

    padded = []
    in_pad = d_in_pad
    for (w, b) in params:
        fin, fout = w.shape
        fout_pad = _round_up(fout, _LANE)
        w_p = jnp.zeros((in_pad, fout_pad), jnp.bfloat16).at[:fin, :fout].set(
            w.astype(jnp.bfloat16))
        b_p = jnp.zeros((1, fout_pad), jnp.float32).at[:, :fout].set(
            b.astype(jnp.float32))
        padded.extend((w_p, b_p))
        in_pad = fout_pad
    out_pad = in_pad

    grid = (b_pad // tb,)

    # Weights/biases: full-array blocks with a constant index_map -> stay VMEM-resident.
    wb_specs = [pl.BlockSpec(p.shape, lambda i: (0, 0)) for p in padded]
    in_specs = [pl.BlockSpec((tb, d_in_pad), lambda i: (i, 0))] + wb_specs
    out_specs = pl.BlockSpec((tb, out_pad), lambda i: (i, 0))

    # VMEM budget & cost estimate from static shapes.
    wb_bytes = sum(p.size * p.dtype.itemsize for p in padded)
    stream_bytes = 2 * (tb * d_in_pad * 2 + tb * out_pad * 4)   # double-buffered in/out
    act_bytes = 4 * tb * max(p.shape[1] for p in padded[::2]) * 4  # f32 intermediates
    vmem_limit = int(min(64 << 20,
                         max(32 << 20, wb_bytes + stream_bytes + act_bytes + (4 << 20))))

    flops = 2 * b_pad * sum(padded[2 * i].shape[0] * padded[2 * i].shape[1]
                            for i in range(len(params)))
    bytes_accessed = (x_pad.size * x_pad.dtype.itemsize + wb_bytes
                      + b_pad * out_pad * 4)
    cost = pl.CostEstimate(flops=flops, transcendentals=0,
                           bytes_accessed=bytes_accessed)

    out_padded = pl.pallas_call(
        tactile_decoder_kernel,
        out_shape=jax.ShapeDtypeStruct((b_pad, out_pad), jnp.float32),
        grid_spec=pltpu.PrefetchScalarGridSpec(
            num_scalar_prefetch=0,
            grid=grid,
            in_specs=in_specs,
            out_specs=out_specs,
        ),
        compiler_params=pltpu.CompilerParams(
            dimension_semantics=("parallel",),
            vmem_limit_bytes=vmem_limit,
        ),
        cost_estimate=cost,
    )(x_pad, *padded)

    return out_padded[:B, :out_dim]


def _reference_forward(img_encoded, params):
    """Pure-JAX mirror of the kernel math (bf16 weights/activations, f32 accumulation)."""
    x = img_encoded.reshape(img_encoded.shape[0], -1).astype(jnp.float32)
    for i, (w, b) in enumerate(params):
        y = jnp.dot(x.astype(jnp.bfloat16), w.astype(jnp.bfloat16),
                    preferred_element_type=jnp.float32) + b.astype(jnp.float32)
        if i < len(params) - 1:
            y = jnp.maximum(y, _LEAKY_SLOPE * y)
        x = y
    return x


if __name__ == "__main__":
    z_dim = 128      # small, forward-consistent stand-in for the default 1024
    num_img = 12
    B = 4

    key = jax.random.PRNGKey(0)
    kx, kp = jax.random.split(key)
    img_encoded = jax.random.normal(kx, (B, 2, z_dim), jnp.float32)
    params = init_params(kp, z_dim=z_dim, num_img=num_img)

    out = tactile_decoder_forward(img_encoded, params)
    out = jax.block_until_ready(out)

    ref = _reference_forward(img_encoded, params)
    assert out.shape == (B, 3 * num_img), out.shape
    assert jnp.allclose(out, ref, atol=2e-2, rtol=2e-2), float(jnp.max(jnp.abs(out - ref)))

    print("KERNEL_OK")
</pallas_src>

<mosaic_0001>
module attributes {stable_mosaic.version = 11 : i64} {
  func.func @tactile_decoder_kernel(%arg0: i32, %arg1: memref<8x256xbf16, #tpu.memory_space<vmem>>, %arg2: memref<256x256xbf16, #tpu.memory_space<vmem>>, %arg3: memref<1x256xf32, #tpu.memory_space<vmem>>, %arg4: memref<256x256xbf16, #tpu.memory_space<vmem>>, %arg5: memref<1x256xf32, #tpu.memory_space<vmem>>, %arg6: memref<256x128xbf16, #tpu.memory_space<vmem>>, %arg7: memref<1x128xf32, #tpu.memory_space<vmem>>, %arg8: memref<128x128xbf16, #tpu.memory_space<vmem>>, %arg9: memref<1x128xf32, #tpu.memory_space<vmem>>, %arg10: memref<128x128xbf16, #tpu.memory_space<vmem>>, %arg11: memref<1x128xf32, #tpu.memory_space<vmem>>, %arg12: memref<8x128xf32, #tpu.memory_space<vmem>>) attributes {dimension_semantics = [#tpu.dimension_semantics<parallel>], iteration_bounds = array<i64: 1>, scalar_prefetch = 0 : i64, scratch_operands = 0 : i64, tpu.core_type = #tpu.core_type<tc>, window_params = [{transform_indices = @transform_0, window_bounds = array<i64: 8, 256>}, {pipeline_mode = #tpu.pipeline_mode<synchronous>, transform_indices = @transform_1, window_bounds = array<i64: 256, 256>}, {pipeline_mode = #tpu.pipeline_mode<synchronous>, transform_indices = @transform_2, window_bounds = array<i64: 1, 256>}, {pipeline_mode = #tpu.pipeline_mode<synchronous>, transform_indices = @transform_3, window_bounds = array<i64: 256, 256>}, {pipeline_mode = #tpu.pipeline_mode<synchronous>, transform_indices = @transform_4, window_bounds = array<i64: 1, 256>}, {pipeline_mode = #tpu.pipeline_mode<synchronous>, transform_indices = @transform_5, window_bounds = array<i64: 256, 128>}, {pipeline_mode = #tpu.pipeline_mode<synchronous>, transform_indices = @transform_6, window_bounds = array<i64: 1, 128>}, {pipeline_mode = #tpu.pipeline_mode<synchronous>, transform_indices = @transform_7, window_bounds = array<i64: 128, 128>}, {pipeline_mode = #tpu.pipeline_mode<synchronous>, transform_indices = @transform_8, window_bounds = array<i64: 1, 128>}, {pipeline_mode = #tpu.pipeline_mode<synchronous>, transform_indices = @transform_9, window_bounds = array<i64: 128, 128>}, {pipeline_mode = #tpu.pipeline_mode<synchronous>, transform_indices = @transform_10, window_bounds = array<i64: 1, 128>}, {transform_indices = @transform_11, window_bounds = array<i64: 8, 128>}]} {
    %c0 = arith.constant 0 : index
    %c0_0 = arith.constant 0 : index
    %0 = vector.load %arg1[%c0, %c0_0] : memref<8x256xbf16, #tpu.memory_space<vmem>>, vector<8x256xbf16>
    %c0_1 = arith.constant 0 : index
    %c0_2 = arith.constant 0 : index
    %1 = vector.load %arg2[%c0_1, %c0_2] : memref<256x256xbf16, #tpu.memory_space<vmem>>, vector<256x256xbf16>
    %cst = arith.constant dense<0.000000e+00> : vector<8x256xf32>
    %2 = tpu.matmul %0, %1, %cst {dimension_numbers = #tpu.dot_dimension_numbers<[1], [0], [0], [1], [0, 0, 1, 1], [], []>} : vector<8x256xbf16>, vector<256x256xbf16>, vector<8x256xf32> -> vector<8x256xf32>
    %c0_3 = arith.constant 0 : index
    %c0_4 = arith.constant 0 : index
    %3 = vector.load %arg3[%c0_3, %c0_4] : memref<1x256xf32, #tpu.memory_space<vmem>>, vector<1x256xf32>
    %4 = vector.broadcast %3 : vector<1x256xf32> to vector<8x256xf32>
    %5 = arith.addf %2, %4 : vector<8x256xf32>
    %cst_5 = arith.constant 1.000000e-01 : f32
    %6 = vector.broadcast %cst_5 : f32 to vector<8x256xf32>
    %7 = arith.mulf %6, %5 : vector<8x256xf32>
    %8 = arith.maximumf %5, %7 : vector<8x256xf32>
    %9 = arith.truncf %8 : vector<8x256xf32> to vector<8x256xbf16>
    %c0_6 = arith.constant 0 : index
    %c0_7 = arith.constant 0 : index
    %10 = vector.load %arg4[%c0_6, %c0_7] : memref<256x256xbf16, #tpu.memory_space<vmem>>, vector<256x256xbf16>
    %cst_8 = arith.constant dense<0.000000e+00> : vector<8x256xf32>
    %11 = tpu.matmul %9, %10, %cst_8 {dimension_numbers = #tpu.dot_dimension_numbers<[1], [0], [0], [1], [0, 0, 1, 1], [], []>} : vector<8x256xbf16>, vector<256x256xbf16>, vector<8x256xf32> -> vector<8x256xf32>
    %c0_9 = arith.constant 0 : index
    %c0_10 = arith.constant 0 : index
    %12 = vector.load %arg5[%c0_9, %c0_10] : memref<1x256xf32, #tpu.memory_space<vmem>>, vector<1x256xf32>
    %13 = vector.broadcast %12 : vector<1x256xf32> to vector<8x256xf32>
    %14 = arith.addf %11, %13 : vector<8x256xf32>
    %cst_11 = arith.constant 1.000000e-01 : f32
    %15 = vector.broadcast %cst_11 : f32 to vector<8x256xf32>
    %16 = arith.mulf %15, %14 : vector<8x256xf32>
    %17 = arith.maximumf %14, %16 : vector<8x256xf32>
    %18 = arith.truncf %17 : vector<8x256xf32> to vector<8x256xbf16>
    %c0_12 = arith.constant 0 : index
    %c0_13 = arith.constant 0 : index
    %19 = vector.load %arg6[%c0_12, %c0_13] : memref<256x128xbf16, #tpu.memory_space<vmem>>, vector<256x128xbf16>
    %cst_14 = arith.constant dense<0.000000e+00> : vector<8x128xf32>
    %20 = tpu.matmul %18, %19, %cst_14 {dimension_numbers = #tpu.dot_dimension_numbers<[1], [0], [0], [1], [0, 0, 1, 1], [], []>} : vector<8x256xbf16>, vector<256x128xbf16>, vector<8x128xf32> -> vector<8x128xf32>
    %c0_15 = arith.constant 0 : index
    %c0_16 = arith.constant 0 : index
    %21 = vector.load %arg7[%c0_15, %c0_16] : memref<1x128xf32, #tpu.memory_space<vmem>>, vector<1x128xf32>
    %22 = vector.broadcast %21 : vector<1x128xf32> to vector<8x128xf32>
    %23 = arith.addf %20, %22 : vector<8x128xf32>
    %cst_17 = arith.constant 1.000000e-01 : f32
    %24 = vector.broadcast %cst_17 : f32 to vector<8x128xf32>
    %25 = arith.mulf %24, %23 : vector<8x128xf32>
    %26 = arith.maximumf %23, %25 : vector<8x128xf32>
    %27 = arith.truncf %26 : vector<8x128xf32> to vector<8x128xbf16>
    %c0_18 = arith.constant 0 : index
    %c0_19 = arith.constant 0 : index
    %28 = vector.load %arg8[%c0_18, %c0_19] : memref<128x128xbf16, #tpu.memory_space<vmem>>, vector<128x128xbf16>
    %cst_20 = arith.constant dense<0.000000e+00> : vector<8x128xf32>
    %29 = tpu.matmul %27, %28, %cst_20 {dimension_numbers = #tpu.dot_dimension_numbers<[1], [0], [0], [1], [0, 0, 1, 1], [], []>} : vector<8x128xbf16>, vector<128x128xbf16>, vector<8x128xf32> -> vector<8x128xf32>
    %c0_21 = arith.constant 0 : index
    %c0_22 = arith.constant 0 : index
    %30 = vector.load %arg9[%c0_21, %c0_22] : memref<1x128xf32, #tpu.memory_space<vmem>>, vector<1x128xf32>
    %31 = vector.broadcast %30 : vector<1x128xf32> to vector<8x128xf32>
    %32 = arith.addf %29, %31 : vector<8x128xf32>
    %cst_23 = arith.constant 1.000000e-01 : f32
    %33 = vector.broadcast %cst_23 : f32 to vector<8x128xf32>
    %34 = arith.mulf %33, %32 : vector<8x128xf32>
    %35 = arith.maximumf %32, %34 : vector<8x128xf32>
    %36 = arith.truncf %35 : vector<8x128xf32> to vector<8x128xbf16>
    %c0_24 = arith.constant 0 : index
    %c0_25 = arith.constant 0 : index
    %37 = vector.load %arg10[%c0_24, %c0_25] : memref<128x128xbf16, #tpu.memory_space<vmem>>, vector<128x128xbf16>
    %cst_26 = arith.constant dense<0.000000e+00> : vector<8x128xf32>
    %38 = tpu.matmul %36, %37, %cst_26 {dimension_numbers = #tpu.dot_dimension_numbers<[1], [0], [0], [1], [0, 0, 1, 1], [], []>} : vector<8x128xbf16>, vector<128x128xbf16>, vector<8x128xf32> -> vector<8x128xf32>
    %c0_27 = arith.constant 0 : index
    %c0_28 = arith.constant 0 : index
    %39 = vector.load %arg11[%c0_27, %c0_28] : memref<1x128xf32, #tpu.memory_space<vmem>>, vector<1x128xf32>
    %40 = vector.broadcast %39 : vector<1x128xf32> to vector<8x128xf32>
    %41 = arith.addf %38, %40 : vector<8x128xf32>
    %c0_29 = arith.constant 0 : index
    %c0_30 = arith.constant 0 : index
    %42 = vector.load %arg12[%c0_29, %c0_30] : memref<8x128xf32, #tpu.memory_space<vmem>>, vector<8x128xf32>
    tpu.vector_store %arg12[%c0_29, %c0_30], %41 {strides = array<i32>} : memref<8x128xf32, #tpu.memory_space<vmem>>, vector<8x128xf32>,
    return
  }
  func.func @transform_0(%arg0: i32) -> (i32, i32) {
    %c0_i32 = arith.constant 0 : i32
    %c0_i32_0 = arith.constant 0 : i32
    return %arg0, %c0_i32 : i32, i32
  }
  func.func @transform_1(%arg0: i32) -> (i32, i32) {
    %c0_i32 = arith.constant 0 : i32
    %c0_i32_0 = arith.constant 0 : i32
    %c0_i32_1 = arith.constant 0 : i32
    return %c0_i32, %c0_i32_0 : i32, i32
  }
  func.func @transform_2(%arg0: i32) -> (i32, i32) {
    %c0_i32 = arith.constant 0 : i32
    %c0_i32_0 = arith.constant 0 : i32
    %c0_i32_1 = arith.constant 0 : i32
    return %c0_i32, %c0_i32_0 : i32, i32
  }
  func.func @transform_3(%arg0: i32) -> (i32, i32) {
    %c0_i32 = arith.constant 0 : i32
    %c0_i32_0 = arith.constant 0 : i32
    %c0_i32_1 = arith.constant 0 : i32
    return %c0_i32, %c0_i32_0 : i32, i32
  }
  func.func @transform_4(%arg0: i32) -> (i32, i32) {
    %c0_i32 = arith.constant 0 : i32
    %c0_i32_0 = arith.constant 0 : i32
    %c0_i32_1 = arith.constant 0 : i32
    return %c0_i32, %c0_i32_0 : i32, i32
  }
  func.func @transform_5(%arg0: i32) -> (i32, i32) {
    %c0_i32 = arith.constant 0 : i32
    %c0_i32_0 = arith.constant 0 : i32
    %c0_i32_1 = arith.constant 0 : i32
    return %c0_i32, %c0_i32_0 : i32, i32
  }
  func.func @transform_6(%arg0: i32) -> (i32, i32) {
    %c0_i32 = arith.constant 0 : i32
    %c0_i32_0 = arith.constant 0 : i32
    %c0_i32_1 = arith.constant 0 : i32
    return %c0_i32, %c0_i32_0 : i32, i32
  }
  func.func @transform_7(%arg0: i32) -> (i32, i32) {
    %c0_i32 = arith.constant 0 : i32
    %c0_i32_0 = arith.constant 0 : i32
    %c0_i32_1 = arith.constant 0 : i32
    return %c0_i32, %c0_i32_0 : i32, i32
  }
  func.func @transform_8(%arg0: i32) -> (i32, i32) {
    %c0_i32 = arith.constant 0 : i32
    %c0_i32_0 = arith.constant 0 : i32
    %c0_i32_1 = arith.constant 0 : i32
    return %c0_i32, %c0_i32_0 : i32, i32
  }
  func.func @transform_9(%arg0: i32) -> (i32, i32) {
    %c0_i32 = arith.constant 0 : i32
    %c0_i32_0 = arith.constant 0 : i32
    %c0_i32_1 = arith.constant 0 : i32
    return %c0_i32, %c0_i32_0 : i32, i32
  }
  func.func @transform_10(%arg0: i32) -> (i32, i32) {
    %c0_i32 = arith.constant 0 : i32
    %c0_i32_0 = arith.constant 0 : i32
    %c0_i32_1 = arith.constant 0 : i32
    return %c0_i32, %c0_i32_0 : i32, i32
  }
  func.func @transform_11(%arg0: i32) -> (i32, i32) {
    %c0_i32 = arith.constant 0 : i32
    %c0_i32_0 = arith.constant 0 : i32
    return %arg0, %c0_i32 : i32, i32
  }
}

</mosaic_0001>

<llo_original>
// kernel: tactile_decoder_forward.1
$region0: #{tactile_decoder_forward.1}
  #allocation0 [shape = 'u32[]', space=smem, size = 0x4, offset = 0x4, fixed_abs, tag = 'smem constant byte address 0x4 - core index']
  #allocation1 [shape = 'u32[72,128]{1,0:T(1,128)}', space=vmem, size = 0x9000, scoped, tag = 'internal scratch']
  %s0 = inlined_call_operand.vmem [shape: bf16[8,256], index: 0, kind: input, shape index: {}]
  %s1 = inlined_call_operand.vmem [shape: bf16[256,256], index: 1, kind: input, shape index: {}]
  %s2 = inlined_call_operand.vmem [shape: f32[1,256], index: 2, kind: input, shape index: {}]
  %s3 = inlined_call_operand.vmem [shape: bf16[256,256], index: 3, kind: input, shape index: {}]
  %s4 = inlined_call_operand.vmem [shape: f32[1,256], index: 4, kind: input, shape index: {}]
  %s5 = inlined_call_operand.vmem [shape: bf16[256,128], index: 5, kind: input, shape index: {}]
  %s6 = inlined_call_operand.vmem [shape: f32[1,128], index: 6, kind: input, shape index: {}]
  %s7 = inlined_call_operand.vmem [shape: bf16[128,128], index: 7, kind: input, shape index: {}]
  %s8 = inlined_call_operand.vmem [shape: f32[1,128], index: 8, kind: input, shape index: {}]
  %s9 = inlined_call_operand.vmem [shape: bf16[128,128], index: 9, kind: input, shape index: {}]
  %s10 = inlined_call_operand.vmem [shape: f32[1,128], index: 10, kind: input, shape index: {}]
  %s11 = inlined_call_operand.vmem [shape: f32[8,128], index: 11, kind: output, shape index: {}]
  %s12 = sld [smem:[#allocation0]]
  $region54: #{tactile_decoder_forward.1} parent=0
    _
  %s14 = ssub.s32 1, %s12
  %s15 = scalar_select 0, %s14, %s12
  // Predicated region
  $region2: #{tactile_decoder_forward.1} parent=0 // pred_check
    _
  $region3: #{tactile_decoder_forward.1} parent=0 // pred_check_branch
    %17 = sbr.rel (0) target = $region5
  $region4: #{tactile_decoder_forward.1} parent=0 // pred_region
    _
  $region5: #{tactile_decoder_forward.1} parent=0 // pred_fallthru
    _
  // Predicated region
  $region6: #{tactile_decoder_forward.1} parent=0 // pred_check
    _
  $region7: #{tactile_decoder_forward.1} parent=0 // pred_check_branch
    %19 = sbr.rel (0) target = $region9
  $region8: #{tactile_decoder_forward.1} parent=0 // pred_region
    _
  $region9: #{tactile_decoder_forward.1} parent=0 // pred_fallthru
    _
  // Predicated region
  $region10: #{tactile_decoder_forward.1} parent=0 // pred_check
    _
  $region11: #{tactile_decoder_forward.1} parent=0 // pred_check_branch
    %21 = sbr.rel (0) target = $region13
  $region12: #{tactile_decoder_forward.1} parent=0 // pred_region
    _
  $region13: #{tactile_decoder_forward.1} parent=0 // pred_fallthru
    _
  // Predicated region
  $region14: #{tactile_decoder_forward.1} parent=0 // pred_check
    _
  $region15: #{tactile_decoder_forward.1} parent=0 // pred_check_branch
    %23 = sbr.rel (0) target = $region17
  $region16: #{tactile_decoder_forward.1} parent=0 // pred_region
    _
  $region17: #{tactile_decoder_forward.1} parent=0 // pred_fallthru
    _
  // Predicated region
  $region18: #{tactile_decoder_forward.1} parent=0 // pred_check
    _
  $region19: #{tactile_decoder_forward.1} parent=0 // pred_check_branch
    %25 = sbr.rel (0) target = $region21
  $region20: #{tactile_decoder_forward.1} parent=0 // pred_region
    _
  $region21: #{tactile_decoder_forward.1} parent=0 // pred_fallthru
    _
  // Predicated region
  $region22: #{tactile_decoder_forward.1} parent=0 // pred_check
    _
  $region23: #{tactile_decoder_forward.1} parent=0 // pred_check_branch
    %27 = sbr.rel (0) target = $region25
  $region24: #{tactile_decoder_forward.1} parent=0 // pred_region
    _
  $region25: #{tactile_decoder_forward.1} parent=0 // pred_fallthru
    _
  // Predicated region
  $region26: #{tactile_decoder_forward.1} parent=0 // pred_check
    _
  $region27: #{tactile_decoder_forward.1} parent=0 // pred_check_branch
    %29 = sbr.rel (0) target = $region29
  $region28: #{tactile_decoder_forward.1} parent=0 // pred_region
    _
  $region29: #{tactile_decoder_forward.1} parent=0 // pred_fallthru
    _
  // Predicated region
  $region30: #{tactile_decoder_forward.1} parent=0 // pred_check
    _
  $region31: #{tactile_decoder_forward.1} parent=0 // pred_check_branch
    %31 = sbr.rel (0) target = $region33
  $region32: #{tactile_decoder_forward.1} parent=0 // pred_region
    _
  $region33: #{tactile_decoder_forward.1} parent=0 // pred_fallthru
    _
  // Predicated region
  $region34: #{tactile_decoder_forward.1} parent=0 // pred_check
    _
  $region35: #{tactile_decoder_forward.1} parent=0 // pred_check_branch
    %33 = sbr.rel (0) target = $region37
  $region36: #{tactile_decoder_forward.1} parent=0 // pred_region
    _
  $region37: #{tactile_decoder_forward.1} parent=0 // pred_fallthru
    _
  // Predicated region
  $region38: #{tactile_decoder_forward.1} parent=0 // pred_check
    _
  $region39: #{tactile_decoder_forward.1} parent=0 // pred_check_branch
    %35 = sbr.rel (0) target = $region41
  $region40: #{tactile_decoder_forward.1} parent=0 // pred_region
    _
  $region41: #{tactile_decoder_forward.1} parent=0 // pred_fallthru
    _
  // Predicated region
  $region42: #{tactile_decoder_forward.1} parent=0 // pred_check
    _
  $region43: #{tactile_decoder_forward.1} parent=0 // pred_check_branch
    %37 = sbr.rel (0) target = $region45
  $region44: #{tactile_decoder_forward.1} parent=0 // pred_region
    _
  $region45: #{tactile_decoder_forward.1} parent=0 // pred_fallthru
    _
  %v38 = vld [vmem:[%s0] sm:$0xff]
  %v39 = vld [vmem:[%s1] sm:$0xff]
  %v40 = vld [vmem:[%s1 + $0x8] sm:$0xff]
  %v41 = vld [vmem:[%s1 + $0x10] sm:$0xff]
  %v42 = vld [vmem:[%s1 + $0x18] sm:$0xff]
  %v43 = vld [vmem:[%s1 + $0x20] sm:$0xff]
  %v44 = vld [vmem:[%s1 + $0x28] sm:$0xff]
  %v45 = vld [vmem:[%s1 + $0x30] sm:$0xff]
  %v46 = vld [vmem:[%s1 + $0x38] sm:$0xff]
  %v47 = vld [vmem:[%s1 + $0x40] sm:$0xff]
  %v48 = vld [vmem:[%s1 + $0x48] sm:$0xff]
  %v49 = vld [vmem:[%s1 + $0x50] sm:$0xff]
  %v50 = vld [vmem:[%s1 + $0x58] sm:$0xff]
  %v51 = vld [vmem:[%s1 + $0x60] sm:$0xff]
  %v52 = vld [vmem:[%s1 + $0x68] sm:$0xff]
  %v53 = vld [vmem:[%s1 + $0x70] sm:$0xff]
  %v54 = vld [vmem:[%s1 + $0x78] sm:$0xff]
  %v55 = vld [vmem:[%s1 + $0x80] sm:$0xff]
  %v56 = vld [vmem:[%s1 + $0x88] sm:$0xff]
  %v57 = vld [vmem:[%s1 + $0x90] sm:$0xff]
  %v58 = vld [vmem:[%s1 + $0x98] sm:$0xff]
  %v59 = vld [vmem:[%s1 + $0xa0] sm:$0xff]
  %v60 = vld [vmem:[%s1 + $0xa8] sm:$0xff]
  %v61 = vld [vmem:[%s1 + $0xb0] sm:$0xff]
  %v62 = vld [vmem:[%s1 + $0xb8] sm:$0xff]
  %v63 = vld [vmem:[%s1 + $0xc0] sm:$0xff]
  %v64 = vld [vmem:[%s1 + $0xc8] sm:$0xff]
  %v65 = vld [vmem:[%s1 + $0xd0] sm:$0xff]
  %v66 = vld [vmem:[%s1 + $0xd8] sm:$0xff]
  %v67 = vld [vmem:[%s1 + $0xe0] sm:$0xff]
  %v68 = vld [vmem:[%s1 + $0xe8] sm:$0xff]
  %v69 = vld [vmem:[%s1 + $0xf0] sm:$0xff]
  %v70 = vld [vmem:[%s1 + $0xf8] sm:$0xff]
  %v71 = vld [vmem:[%s2] sm:$0x3]
  %v73 = vperm.slane %v71, 0
  %v74 = vperm.slane %v71, 1
  %v78 = vunpack.c.l.b16 %v38
  %v79 = vunpack.c.h.b16 %v38
  %v80 = vpack.c.b16 %v78, %v78
  %v81 = vpack.c.b16 %v79, %v79
  %v116 = vunpack.c.l.b16 %v39
  %v117 = vunpack.c.h.b16 %v39
  %v118 = vunpack.c.l.b16 %v40
  %v119 = vunpack.c.h.b16 %v40
  %v120 = vunpack.c.l.b16 %v41
  %v121 = vunpack.c.h.b16 %v41
  %v122 = vunpack.c.l.b16 %v42
  %v123 = vunpack.c.h.b16 %v42
  %v124 = vunpack.c.l.b16 %v43
  %v125 = vunpack.c.h.b16 %v43
  %v126 = vunpack.c.l.b16 %v44
  %v127 = vunpack.c.h.b16 %v44
  %v128 = vunpack.c.l.b16 %v45
  %v129 = vunpack.c.h.b16 %v45
  %v130 = vunpack.c.l.b16 %v46
  %v131 = vunpack.c.h.b16 %v46
  %v132 = vunpack.c.l.b16 %v47
  %v133 = vunpack.c.h.b16 %v47
  %v134 = vunpack.c.l.b16 %v48
  %v135 = vunpack.c.h.b16 %v48
  %v136 = vunpack.c.l.b16 %v49
  %v137 = vunpack.c.h.b16 %v49
  %v138 = vunpack.c.l.b16 %v50
  %v139 = vunpack.c.h.b16 %v50
  %v140 = vunpack.c.l.b16 %v51
  %v141 = vunpack.c.h.b16 %v51
  %v142 = vunpack.c.l.b16 %v52
  %v143 = vunpack.c.h.b16 %v52
  %v144 = vunpack.c.l.b16 %v53
  %v145 = vunpack.c.h.b16 %v53
  %v146 = vunpack.c.l.b16 %v54
  %v147 = vunpack.c.h.b16 %v54
  %v148 = vunpack.c.l.b16 %v55
  %v149 = vunpack.c.h.b16 %v55
  %v150 = vunpack.c.l.b16 %v56
  %v151 = vunpack.c.h.b16 %v56
  %v152 = vunpack.c.l.b16 %v57
  %v153 = vunpack.c.h.b16 %v57
  %v154 = vunpack.c.l.b16 %v58
  %v155 = vunpack.c.h.b16 %v58
  %v156 = vunpack.c.l.b16 %v59
  %v157 = vunpack.c.h.b16 %v59
  %v158 = vunpack.c.l.b16 %v60
  %v159 = vunpack.c.h.b16 %v60
  %v160 = vunpack.c.l.b16 %v61
  %v161 = vunpack.c.h.b16 %v61
  %v162 = vunpack.c.l.b16 %v62
  %v163 = vunpack.c.h.b16 %v62
  %v164 = vunpack.c.l.b16 %v63
  %v165 = vunpack.c.h.b16 %v63
  %v166 = vunpack.c.l.b16 %v64
  %v167 = vunpack.c.h.b16 %v64
  %v168 = vunpack.c.l.b16 %v65
  %v169 = vunpack.c.h.b16 %v65
  %v170 = vunpack.c.l.b16 %v66
  %v171 = vunpack.c.h.b16 %v66
  %v172 = vunpack.c.l.b16 %v67
  %v173 = vunpack.c.h.b16 %v67
  %v174 = vunpack.c.l.b16 %v68
  %v175 = vunpack.c.h.b16 %v68
  %v176 = vunpack.c.l.b16 %v69
  %v177 = vunpack.c.h.b16 %v69
  %v178 = vunpack.c.l.b16 %v70
  %v179 = vunpack.c.h.b16 %v70
  %v180 = vpack.c.b16 %v118, %v116
  %v181 = vpack.c.b16 %v119, %v117
  %v182 = vpack.c.b16 %v122, %v120
  %v183 = vpack.c.b16 %v123, %v121
  %v184 = vpack.c.b16 %v126, %v124
  %v185 = vpack.c.b16 %v127, %v125
  %v186 = vpack.c.b16 %v130, %v128
  %v187 = vpack.c.b16 %v131, %v129
  %v188 = vpack.c.b16 %v134, %v132
  %v189 = vpack.c.b16 %v135, %v133
  %v190 = vpack.c.b16 %v138, %v136
  %v191 = vpack.c.b16 %v139, %v137
  %v192 = vpack.c.b16 %v142, %v140
  %v193 = vpack.c.b16 %v143, %v141
  %v194 = vpack.c.b16 %v146, %v144
  %v195 = vpack.c.b16 %v147, %v145
  %v196 = vpack.c.b16 %v150, %v148
  %v197 = vpack.c.b16 %v151, %v149
  %v198 = vpack.c.b16 %v154, %v152
  %v199 = vpack.c.b16 %v155, %v153
  %v200 = vpack.c.b16 %v158, %v156
  %v201 = vpack.c.b16 %v159, %v157
  %v202 = vpack.c.b16 %v162, %v160
  %v203 = vpack.c.b16 %v163, %v161
  %v204 = vpack.c.b16 %v166, %v164
  %v205 = vpack.c.b16 %v167, %v165
  %v206 = vpack.c.b16 %v170, %v168
  %v207 = vpack.c.b16 %v171, %v169
  %v208 = vpack.c.b16 %v174, %v172
  %v209 = vpack.c.b16 %v175, %v173
  %v210 = vpack.c.b16 %v178, %v176
  %v211 = vpack.c.b16 %v179, %v177
  %244 = vmatpush.bf16.msra.mxu0 %v194
  %245 = vmatpush.bf16.msra.mxu0 %v192
  %246 = vmatpush.bf16.msra.mxu0 %v190
  %247 = vmatpush.bf16.msra.mxu0 %v188
  %248 = vmatpush.bf16.msra.mxu0 %v186
  %249 = vmatpush.bf16.msra.mxu0 %v184
  %250 = vmatpush.bf16.msra.mxu0 %v182
  %251 = vmatpush.bf16.msra.mxu0 %v180
  %252 = vmatmul.bf16.gmra.mxu0 %v80
  %v253 = vpop.f32.mrf.mxu0
  %v254 = vadd.f32 %v73, %v253
  %v255 = vpop.f32.mrf.mxu0
  %256 = vdwg.mxu0
  %257 = vmatpush.bf16.msra.mxu0 %v210
  %258 = vmatpush.bf16.msra.mxu0 %v208
  %259 = vmatpush.bf16.msra.mxu0 %v206
  %260 = vmatpush.bf16.msra.mxu0 %v204
  %261 = vmatpush.bf16.msra.mxu0 %v202
  %262 = vmatpush.bf16.msra.mxu0 %v200
  %263 = vmatpush.bf16.msra.mxu0 %v198
  %264 = vmatpush.bf16.msra.mxu0 %v196
  %265 = vmatmul.bf16.gmra.mxu0 %v81
  %v266 = vpop.f32.mrf.mxu0
  %v267 = vadd.f32 %v254, %v266
  %v268 = vpop.f32.mrf.mxu0
  %269 = vdwg.mxu0
  %270 = vmatpush.bf16.msra.mxu0 %v195
  %271 = vmatpush.bf16.msra.mxu0 %v193
  %272 = vmatpush.bf16.msra.mxu0 %v191
  %273 = vmatpush.bf16.msra.mxu0 %v189
  %274 = vmatpush.bf16.msra.mxu0 %v187
  %275 = vmatpush.bf16.msra.mxu0 %v185
  %276 = vmatpush.bf16.msra.mxu0 %v183
  %277 = vmatpush.bf16.msra.mxu0 %v181
  %278 = vmatmul.bf16.gmra.mxu0 %v80
  %v279 = vpop.f32.mrf.mxu0
  %v280 = vadd.f32 %v74, %v279
  %v281 = vpop.f32.mrf.mxu0
  %282 = vdwg.mxu0
  %283 = vmatpush.bf16.msra.mxu0 %v211
  %284 = vmatpush.bf16.msra.mxu0 %v209
  %285 = vmatpush.bf16.msra.mxu0 %v207
  %286 = vmatpush.bf16.msra.mxu0 %v205
  %287 = vmatpush.bf16.msra.mxu0 %v203
  %288 = vmatpush.bf16.msra.mxu0 %v201
  %289 = vmatpush.bf16.msra.mxu0 %v199
  %290 = vmatpush.bf16.msra.mxu0 %v197
  %291 = vmatmul.bf16.gmra.mxu0 %v81
  %v292 = vpop.f32.mrf.mxu0
  %v293 = vadd.f32 %v280, %v292
  %v294 = vpop.f32.mrf.mxu0
  %295 = vdwg.mxu0
  %v296 = vmul.f32 %v267, 0.1
  %v297 = vmul.f32 %v293, 0.1
  %v298 = vmax.f32 %v267, %v296
  %v299 = vmax.f32 %v293, %v297
  %v300 = vpack.c.bf16 %v298, %v298
  %v301 = vpack.c.bf16 %v299, %v299
  %v302 = vld [vmem:[%s3] sm:$0xff]
  %v303 = vld [vmem:[%s3 + $0x8] sm:$0xff]
  %v304 = vld [vmem:[%s3 + $0x10] sm:$0xff]
  %v305 = vld [vmem:[%s3 + $0x18] sm:$0xff]
  %v306 = vld [vmem:[%s3 + $0x20] sm:$0xff]
  %v307 = vld [vmem:[%s3 + $0x28] sm:$0xff]
  %v308 = vld [vmem:[%s3 + $0x30] sm:$0xff]
  %v309 = vld [vmem:[%s3 + $0x38] sm:$0xff]
  %v310 = vld [vmem:[%s3 + $0x40] sm:$0xff]
  %v311 = vld [vmem:[%s3 + $0x48] sm:$0xff]
  %v312 = vld [vmem:[%s3 + $0x50] sm:$0xff]
  %v313 = vld [vmem:[%s3 + $0x58] sm:$0xff]
  %v314 = vld [vmem:[%s3 + $0x60] sm:$0xff]
  %v315 = vld [vmem:[%s3 + $0x68] sm:$0xff]
  %v316 = vld [vmem:[%s3 + $0x70] sm:$0xff]
  %v317 = vld [vmem:[%s3 + $0x78] sm:$0xff]
  %v318 = vld [vmem:[%s3 + $0x80] sm:$0xff]
  %v319 = vld [vmem:[%s3 + $0x88] sm:$0xff]
  %v320 = vld [vmem:[%s3 + $0x90] sm:$0xff]
  %v321 = vld [vmem:[%s3 + $0x98] sm:$0xff]
  %v322 = vld [vmem:[%s3 + $0xa0] sm:$0xff]
  %v323 = vld [vmem:[%s3 + $0xa8] sm:$0xff]
  %v324 = vld [vmem:[%s3 + $0xb0] sm:$0xff]
  %v325 = vld [vmem:[%s3 + $0xb8] sm:$0xff]
  %v326 = vld [vmem:[%s3 + $0xc0] sm:$0xff]
  %v327 = vld [vmem:[%s3 + $0xc8] sm:$0xff]
  %v328 = vld [vmem:[%s3 + $0xd0] sm:$0xff]
  %v329 = vld [vmem:[%s3 + $0xd8] sm:$0xff]
  %v330 = vld [vmem:[%s3 + $0xe0] sm:$0xff]
  %v331 = vld [vmem:[%s3 + $0xe8] sm:$0xff]
  %v332 = vld [vmem:[%s3 + $0xf0] sm:$0xff]
  %v333 = vld [vmem:[%s3 + $0xf8] sm:$0xff]
  %v334 = vld [vmem:[%s4] sm:$0x3]
  %v336 = vperm.slane %v334, 0
  %v337 = vperm.slane %v334, 1
  %v372 = vunpack.c.l.b16 %v302
  %v373 = vunpack.c.h.b16 %v302
  %v374 = vunpack.c.l.b16 %v303
  %v375 = vunpack.c.h.b16 %v303
  %v376 = vunpack.c.l.b16 %v304
  %v377 = vunpack.c.h.b16 %v304
  %v378 = vunpack.c.l.b16 %v305
  %v379 = vunpack.c.h.b16 %v305
  %v380 = vunpack.c.l.b16 %v306
  %v381 = vunpack.c.h.b16 %v306
  %v382 = vunpack.c.l.b16 %v307
  %v383 = vunpack.c.h.b16 %v307
  %v384 = vunpack.c.l.b16 %v308
  %v385 = vunpack.c.h.b16 %v308
  %v386 = vunpack.c.l.b16 %v309
  %v387 = vunpack.c.h.b16 %v309
  %v388 = vunpack.c.l.b16 %v310
  %v389 = vunpack.c.h.b16 %v310
  %v390 = vunpack.c.l.b16 %v311
  %v391 = vunpack.c.h.b16 %v311
  %v392 = vunpack.c.l.b16 %v312
  %v393 = vunpack.c.h.b16 %v312
  %v394 = vunpack.c.l.b16 %v313
  %v395 = vunpack.c.h.b16 %v313
  %v396 = vunpack.c.l.b16 %v314
  %v397 = vunpack.c.h.b16 %v314
  %v398 = vunpack.c.l.b16 %v315
  %v399 = vunpack.c.h.b16 %v315
  %v400 = vunpack.c.l.b16 %v316
  %v401 = vunpack.c.h.b16 %v316
  %v402 = vunpack.c.l.b16 %v317
  %v403 = vunpack.c.h.b16 %v317
  %v404 = vunpack.c.l.b16 %v318
  %v405 = vunpack.c.h.b16 %v318
  %v406 = vunpack.c.l.b16 %v319
  %v407 = vunpack.c.h.b16 %v319
  %v408 = vunpack.c.l.b16 %v320
  %v409 = vunpack.c.h.b16 %v320
  %v410 = vunpack.c.l.b16 %v321
  %v411 = vunpack.c.h.b16 %v321
  %v412 = vunpack.c.l.b16 %v322
  %v413 = vunpack.c.h.b16 %v322
  %v414 = vunpack.c.l.b16 %v323
  %v415 = vunpack.c.h.b16 %v323
  %v416 = vunpack.c.l.b16 %v324
  %v417 = vunpack.c.h.b16 %v324
  %v418 = vunpack.c.l.b16 %v325
  %v419 = vunpack.c.h.b16 %v325
  %v420 = vunpack.c.l.b16 %v326
  %v421 = vunpack.c.h.b16 %v326
  %v422 = vunpack.c.l.b16 %v327
  %v423 = vunpack.c.h.b16 %v327
  %v424 = vunpack.c.l.b16 %v328
  %v425 = vunpack.c.h.b16 %v328
  %v426 = vunpack.c.l.b16 %v329
  %v427 = vunpack.c.h.b16 %v329
  %v428 = vunpack.c.l.b16 %v330
  %v429 = vunpack.c.h.b16 %v330
  %v430 = vunpack.c.l.b16 %v331
  %v431 = vunpack.c.h.b16 %v331
  %v432 = vunpack.c.l.b16 %v332
  %v433 = vunpack.c.h.b16 %v332
  %v434 = vunpack.c.l.b16 %v333
  %v435 = vunpack.c.h.b16 %v333
  %v436 = vpack.c.b16 %v374, %v372
  %v437 = vpack.c.b16 %v375, %v373
  %v438 = vpack.c.b16 %v378, %v376
  %v439 = vpack.c.b16 %v379, %v377
  %v440 = vpack.c.b16 %v382, %v380
  %v441 = vpack.c.b16 %v383, %v381
  %v442 = vpack.c.b16 %v386, %v384
  %v443 = vpack.c.b16 %v387, %v385
  %v444 = vpack.c.b16 %v390, %v388
  %v445 = vpack.c.b16 %v391, %v389
  %v446 = vpack.c.b16 %v394, %v392
  %v447 = vpack.c.b16 %v395, %v393
  %v448 = vpack.c.b16 %v398, %v396
  %v449 = vpack.c.b16 %v399, %v397
  %v450 = vpack.c.b16 %v402, %v400
  %v451 = vpack.c.b16 %v403, %v401
  %v452 = vpack.c.b16 %v406, %v404
  %v453 = vpack.c.b16 %v407, %v405
  %v454 = vpack.c.b16 %v410, %v408
  %v455 = vpack.c.b16 %v411, %v409
  %v456 = vpack.c.b16 %v414, %v412
  %v457 = vpack.c.b16 %v415, %v413
  %v458 = vpack.c.b16 %v418, %v416
  %v459 = vpack.c.b16 %v419, %v417
  %v460 = vpack.c.b16 %v422, %v420
  %v461 = vpack.c.b16 %v423, %v421
  %v462 = vpack.c.b16 %v426, %v424
  %v463 = vpack.c.b16 %v427, %v425
  %v464 = vpack.c.b16 %v430, %v428
  %v465 = vpack.c.b16 %v431, %v429
  %v466 = vpack.c.b16 %v434, %v432
  %v467 = vpack.c.b16 %v435, %v433
  %500 = vmatpush.bf16.msra.mxu0 %v450
  %501 = vmatpush.bf16.msra.mxu0 %v448
  %502 = vmatpush.bf16.msra.mxu0 %v446
  %503 = vmatpush.bf16.msra.mxu0 %v444
  %504 = vmatpush.bf16.msra.mxu0 %v442
  %505 = vmatpush.bf16.msra.mxu0 %v440
  %506 = vmatpush.bf16.msra.mxu0 %v438
  %507 = vmatpush.bf16.msra.mxu0 %v436
  %508 = vmatmul.bf16.gmra.mxu0 %v300
  %v509 = vpop.f32.mrf.mxu0
  %v510 = vadd.f32 %v336, %v509
  %v511 = vpop.f32.mrf.mxu0
  %512 = vdwg.mxu0
  %513 = vmatpush.bf16.msra.mxu0 %v466
  %514 = vmatpush.bf16.msra.mxu0 %v464
  %515 = vmatpush.bf16.msra.mxu0 %v462
  %516 = vmatpush.bf16.msra.mxu0 %v460
  %517 = vmatpush.bf16.msra.mxu0 %v458
  %518 = vmatpush.bf16.msra.mxu0 %v456
  %519 = vmatpush.bf16.msra.mxu0 %v454
  %520 = vmatpush.bf16.msra.mxu0 %v452
  %521 = vmatmul.bf16.gmra.mxu0 %v301
  %v522 = vpop.f32.mrf.mxu0
  %v523 = vadd.f32 %v510, %v522
  %v524 = vpop.f32.mrf.mxu0
  %525 = vdwg.mxu0
  %526 = vmatpush.bf16.msra.mxu0 %v451
  %527 = vmatpush.bf16.msra.mxu0 %v449
  %528 = vmatpush.bf16.msra.mxu0 %v447
  %529 = vmatpush.bf16.msra.mxu0 %v445
  %530 = vmatpush.bf16.msra.mxu0 %v443
  %531 = vmatpush.bf16.msra.mxu0 %v441
  %532 = vmatpush.bf16.msra.mxu0 %v439
  %533 = vmatpush.bf16.msra.mxu0 %v437
  %534 = vmatmul.bf16.gmra.mxu0 %v300
  %v535 = vpop.f32.mrf.mxu0
  %v536 = vadd.f32 %v337, %v535
  %v537 = vpop.f32.mrf.mxu0
  %538 = vdwg.mxu0
  %539 = vmatpush.bf16.msra.mxu0 %v467
  %540 = vmatpush.bf16.msra.mxu0 %v465
  %541 = vmatpush.bf16.msra.mxu0 %v463
  %542 = vmatpush.bf16.msra.mxu0 %v461
  %543 = vmatpush.bf16.msra.mxu0 %v459
  %544 = vmatpush.bf16.msra.mxu0 %v457
  %545 = vmatpush.bf16.msra.mxu0 %v455
  %546 = vmatpush.bf16.msra.mxu0 %v453
  %547 = vmatmul.bf16.gmra.mxu0 %v301
  %v548 = vpop.f32.mrf.mxu0
  %v549 = vadd.f32 %v536, %v548
  %v550 = vpop.f32.mrf.mxu0
  %551 = vdwg.mxu0
  %v552 = vmul.f32 %v523, 0.1
  %v553 = vmul.f32 %v549, 0.1
  %v554 = vmax.f32 %v523, %v552
  %v555 = vmax.f32 %v549, %v553
  %v556 = vpack.c.bf16 %v554, %v554
  %v557 = vpack.c.bf16 %v555, %v555
  %v558 = vld [vmem:[%s5] sm:$0xf]
  %v559 = vld [vmem:[%s5 + $0x4] sm:$0xf]
  %v560 = vld [vmem:[%s5 + $0x8] sm:$0xf]
  %v561 = vld [vmem:[%s5 + $0xc] sm:$0xf]
  %v562 = vld [vmem:[%s5 + $0x10] sm:$0xf]
  %v563 = vld [vmem:[%s5 + $0x14] sm:$0xf]
  %v564 = vld [vmem:[%s5 + $0x18] sm:$0xf]
  %v565 = vld [vmem:[%s5 + $0x1c] sm:$0xf]
  %v566 = vld [vmem:[%s5 + $0x20] sm:$0xf]
  %v567 = vld [vmem:[%s5 + $0x24] sm:$0xf]
  %v568 = vld [vmem:[%s5 + $0x28] sm:$0xf]
  %v569 = vld [vmem:[%s5 + $0x2c] sm:$0xf]
  %v570 = vld [vmem:[%s5 + $0x30] sm:$0xf]
  %v571 = vld [vmem:[%s5 + $0x34] sm:$0xf]
  %v572 = vld [vmem:[%s5 + $0x38] sm:$0xf]
  %v573 = vld [vmem:[%s5 + $0x3c] sm:$0xf]
  %v574 = vld [vmem:[%s5 + $0x40] sm:$0xf]
  %v575 = vld [vmem:[%s5 + $0x44] sm:$0xf]
  %v576 = vld [vmem:[%s5 + $0x48] sm:$0xf]
  %v577 = vld [vmem:[%s5 + $0x4c] sm:$0xf]
  %v578 = vld [vmem:[%s5 + $0x50] sm:$0xf]
  %v579 = vld [vmem:[%s5 + $0x54] sm:$0xf]
  %v580 = vld [vmem:[%s5 + $0x58] sm:$0xf]
  %v581 = vld [vmem:[%s5 + $0x5c] sm:$0xf]
  %v582 = vld [vmem:[%s5 + $0x60] sm:$0xf]
  %v583 = vld [vmem:[%s5 + $0x64] sm:$0xf]
  %v584 = vld [vmem:[%s5 + $0x68] sm:$0xf]
  %v585 = vld [vmem:[%s5 + $0x6c] sm:$0xf]
  %v586 = vld [vmem:[%s5 + $0x70] sm:$0xf]
  %v587 = vld [vmem:[%s5 + $0x74] sm:$0xf]
  %v588 = vld [vmem:[%s5 + $0x78] sm:$0xf]
  %v589 = vld [vmem:[%s5 + $0x7c] sm:$0xf]
  %v590 = vld [vmem:[%s6] sm:$0x1]
  %v592 = vperm.slane %v590, 0
  %v626 = vunpack.c.l.b16 %v558
  %v627 = vunpack.c.l.b16 %v559
  %v628 = vunpack.c.l.b16 %v560
  %v629 = vunpack.c.l.b16 %v561
  %v630 = vunpack.c.l.b16 %v562
  %v631 = vunpack.c.l.b16 %v563
  %v632 = vunpack.c.l.b16 %v564
  %v633 = vunpack.c.l.b16 %v565
  %v634 = vunpack.c.l.b16 %v566
  %v635 = vunpack.c.l.b16 %v567
  %v636 = vunpack.c.l.b16 %v568
  %v637 = vunpack.c.l.b16 %v569
  %v638 = vunpack.c.l.b16 %v570
  %v639 = vunpack.c.l.b16 %v571
  %v640 = vunpack.c.l.b16 %v572
  %v641 = vunpack.c.l.b16 %v573
  %v642 = vunpack.c.l.b16 %v574
  %v643 = vunpack.c.l.b16 %v575
  %v644 = vunpack.c.l.b16 %v576
  %v645 = vunpack.c.l.b16 %v577
  %v646 = vunpack.c.l.b16 %v578
  %v647 = vunpack.c.l.b16 %v579
  %v648 = vunpack.c.l.b16 %v580
  %v649 = vunpack.c.l.b16 %v581
  %v650 = vunpack.c.l.b16 %v582
  %v651 = vunpack.c.l.b16 %v583
  %v652 = vunpack.c.l.b16 %v584
  %v653 = vunpack.c.l.b16 %v585
  %v654 = vunpack.c.l.b16 %v586
  %v655 = vunpack.c.l.b16 %v587
  %v656 = vunpack.c.l.b16 %v588
  %v657 = vunpack.c.l.b16 %v589
  %v658 = vpack.c.b16 %v627, %v626
  %v659 = vpack.c.b16 %v629, %v628
  %v660 = vpack.c.b16 %v631, %v630
  %v661 = vpack.c.b16 %v633, %v632
  %v662 = vpack.c.b16 %v635, %v634
  %v663 = vpack.c.b16 %v637, %v636
  %v664 = vpack.c.b16 %v639, %v638
  %v665 = vpack.c.b16 %v641, %v640
  %v666 = vpack.c.b16 %v643, %v642
  %v667 = vpack.c.b16 %v645, %v644
  %v668 = vpack.c.b16 %v647, %v646
  %v669 = vpack.c.b16 %v649, %v648
  %v670 = vpack.c.b16 %v651, %v650
  %v671 = vpack.c.b16 %v653, %v652
  %v672 = vpack.c.b16 %v655, %v654
  %v673 = vpack.c.b16 %v657, %v656
  %690 = vmatpush.bf16.msra.mxu0 %v665
  %691 = vmatpush.bf16.msra.mxu0 %v664
  %692 = vmatpush.bf16.msra.mxu0 %v663
  %693 = vmatpush.bf16.msra.mxu0 %v662
  %694 = vmatpush.bf16.msra.mxu0 %v661
  %695 = vmatpush.bf16.msra.mxu0 %v660
  %696 = vmatpush.bf16.msra.mxu0 %v659
  %697 = vmatpush.bf16.msra.mxu0 %v658
  %698 = vmatmul.bf16.gmra.mxu0 %v556
  %v699 = vpop.f32.mrf.mxu0
  %v700 = vadd.f32 %v592, %v699
  %v701 = vpop.f32.mrf.mxu0
  %702 = vdwg.mxu0
  %703 = vmatpush.bf16.msra.mxu0 %v673
  %704 = vmatpush.bf16.msra.mxu0 %v672
  %705 = vmatpush.bf16.msra.mxu0 %v671
  %706 = vmatpush.bf16.msra.mxu0 %v670
  %707 = vmatpush.bf16.msra.mxu0 %v669
  %708 = vmatpush.bf16.msra.mxu0 %v668
  %709 = vmatpush.bf16.msra.mxu0 %v667
  %710 = vmatpush.bf16.msra.mxu0 %v666
  %711 = vmatmul.bf16.gmra.mxu0 %v557
  %v712 = vpop.f32.mrf.mxu0
  %v713 = vadd.f32 %v700, %v712
  %v714 = vpop.f32.mrf.mxu0
  %715 = vdwg.mxu0
  %v716 = vmul.f32 %v713, 0.1
  %v717 = vmax.f32 %v713, %v716
  %v718 = vpack.c.bf16 %v717, %v717
  %v719 = vld [vmem:[%s7] sm:$0xf]
  %v720 = vld [vmem:[%s7 + $0x4] sm:$0xf]
  %v721 = vld [vmem:[%s7 + $0x8] sm:$0xf]
  %v722 = vld [vmem:[%s7 + $0xc] sm:$0xf]
  %v723 = vld [vmem:[%s7 + $0x10] sm:$0xf]
  %v724 = vld [vmem:[%s7 + $0x14] sm:$0xf]
  %v725 = vld [vmem:[%s7 + $0x18] sm:$0xf]
  %v726 = vld [vmem:[%s7 + $0x1c] sm:$0xf]
  %v727 = vld [vmem:[%s7 + $0x20] sm:$0xf]
  %v728 = vld [vmem:[%s7 + $0x24] sm:$0xf]
  %v729 = vld [vmem:[%s7 + $0x28] sm:$0xf]
  %v730 = vld [vmem:[%s7 + $0x2c] sm:$0xf]
  %v731 = vld [vmem:[%s7 + $0x30] sm:$0xf]
  %v732 = vld [vmem:[%s7 + $0x34] sm:$0xf]
  %v733 = vld [vmem:[%s7 + $0x38] sm:$0xf]
  %v734 = vld [vmem:[%s7 + $0x3c] sm:$0xf]
  %v735 = vld [vmem:[%s8] sm:$0x1]
  %v737 = vperm.slane %v735, 0
  %v755 = vunpack.c.l.b16 %v719
  %v756 = vunpack.c.l.b16 %v720
  %v757 = vunpack.c.l.b16 %v721
  %v758 = vunpack.c.l.b16 %v722
  %v759 = vunpack.c.l.b16 %v723
  %v760 = vunpack.c.l.b16 %v724
  %v761 = vunpack.c.l.b16 %v725
  %v762 = vunpack.c.l.b16 %v726
  %v763 = vunpack.c.l.b16 %v727
  %v764 = vunpack.c.l.b16 %v728
  %v765 = vunpack.c.l.b16 %v729
  %v766 = vunpack.c.l.b16 %v730
  %v767 = vunpack.c.l.b16 %v731
  %v768 = vunpack.c.l.b16 %v732
  %v769 = vunpack.c.l.b16 %v733
  %v770 = vunpack.c.l.b16 %v734
  %v771 = vpack.c.b16 %v756, %v755
  %v772 = vpack.c.b16 %v758, %v757
  %v773 = vpack.c.b16 %v760, %v759
  %v774 = vpack.c.b16 %v762, %v761
  %v775 = vpack.c.b16 %v764, %v763
  %v776 = vpack.c.b16 %v766, %v765
  %v777 = vpack.c.b16 %v768, %v767
  %v778 = vpack.c.b16 %v770, %v769
  %787 = vmatpush.bf16.msra.mxu0 %v778
  %788 = vmatpush.bf16.msra.mxu0 %v777
  %789 = vmatpush.bf16.msra.mxu0 %v776
  %790 = vmatpush.bf16.msra.mxu0 %v775
  %791 = vmatpush.bf16.msra.mxu0 %v774
  %792 = vmatpush.bf16.msra.mxu0 %v773
  %793 = vmatpush.bf16.msra.mxu0 %v772
  %794 = vmatpush.bf16.msra.mxu0 %v771
  %795 = vmatmul.bf16.gmra.mxu0 %v718
  %v796 = vpop.f32.mrf.mxu0
  %v797 = vadd.f32 %v737, %v796
  %v798 = vpop.f32.mrf.mxu0
  %799 = vdwg.mxu0
  %v800 = vmul.f32 %v797, 0.1
  %v801 = vmax.f32 %v797, %v800
  %v802 = vpack.c.bf16 %v801, %v801
  %v803 = vld [vmem:[%s9] sm:$0xf]
  %v804 = vld [vmem:[%s9 + $0x4] sm:$0xf]
  %v805 = vld [vmem:[%s9 + $0x8] sm:$0xf]
  %v806 = vld [vmem:[%s9 + $0xc] sm:$0xf]
  %v807 = vld [vmem:[%s9 + $0x10] sm:$0xf]
  %v808 = vld [vmem:[%s9 + $0x14] sm:$0xf]
  %v809 = vld [vmem:[%s9 + $0x18] sm:$0xf]
  %v810 = vld [vmem:[%s9 + $0x1c] sm:$0xf]
  %v811 = vld [vmem:[%s9 + $0x20] sm:$0xf]
  %v812 = vld [vmem:[%s9 + $0x24] sm:$0xf]
  %v813 = vld [vmem:[%s9 + $0x28] sm:$0xf]
  %v814 = vld [vmem:[%s9 + $0x2c] sm:$0xf]
  %v815 = vld [vmem:[%s9 + $0x30] sm:$0xf]
  %v816 = vld [vmem:[%s9 + $0x34] sm:$0xf]
  %v817 = vld [vmem:[%s9 + $0x38] sm:$0xf]
  %v818 = vld [vmem:[%s9 + $0x3c] sm:$0xf]
  %v819 = vld [vmem:[%s10] sm:$0x1]
  %v821 = vperm.slane %v819, 0
  %v839 = vunpack.c.l.b16 %v803
  %v840 = vunpack.c.l.b16 %v804
  %v841 = vunpack.c.l.b16 %v805
  %v842 = vunpack.c.l.b16 %v806
  %v843 = vunpack.c.l.b16 %v807
  %v844 = vunpack.c.l.b16 %v808
  %v845 = vunpack.c.l.b16 %v809
  %v846 = vunpack.c.l.b16 %v810
  %v847 = vunpack.c.l.b16 %v811
  %v848 = vunpack.c.l.b16 %v812
  %v849 = vunpack.c.l.b16 %v813
  %v850 = vunpack.c.l.b16 %v814
  %v851 = vunpack.c.l.b16 %v815
  %v852 = vunpack.c.l.b16 %v816
  %v853 = vunpack.c.l.b16 %v817
  %v854 = vunpack.c.l.b16 %v818
  %v855 = vpack.c.b16 %v840, %v839
  %v856 = vpack.c.b16 %v842, %v841
  %v857 = vpack.c.b16 %v844, %v843
  %v858 = vpack.c.b16 %v846, %v845
  %v859 = vpack.c.b16 %v848, %v847
  %v860 = vpack.c.b16 %v850, %v849
  %v861 = vpack.c.b16 %v852, %v851
  %v862 = vpack.c.b16 %v854, %v853
  %871 = vmatpush.bf16.msra.mxu0 %v862
  %872 = vmatpush.bf16.msra.mxu0 %v861
  %873 = vmatpush.bf16.msra.mxu0 %v860
  %874 = vmatpush.bf16.msra.mxu0 %v859
  %875 = vmatpush.bf16.msra.mxu0 %v858
  %876 = vmatpush.bf16.msra.mxu0 %v857
  %877 = vmatpush.bf16.msra.mxu0 %v856
  %878 = vmatpush.bf16.msra.mxu0 %v855
  %879 = vmatmul.bf16.gmra.mxu0 %v802
  %v880 = vpop.f32.mrf.mxu0
  %v881 = vadd.f32 %v821, %v880
  %v882 = vpop.f32.mrf.mxu0
  %883 = vdwg.mxu0
  %884 = vst [vmem:[%s11] sm:$0xff] %v881
  // Predicated region
  $region46: #{tactile_decoder_forward.1} parent=0 // pred_check
    _
  $region47: #{tactile_decoder_forward.1} parent=0 // pred_check_branch
    %886 = sbr.rel (0) target = $region49
  $region48: #{tactile_decoder_forward.1} parent=0 // pred_region
    _
  $region49: #{tactile_decoder_forward.1} parent=0 // pred_fallthru
    _
  // Predicated region
  $region50: #{tactile_decoder_forward.1} parent=0 // pred_check
    _
  $region51: #{tactile_decoder_forward.1} parent=0 // pred_check_branch
    %888 = sbr.rel (0) target = $region53
  $region52: #{tactile_decoder_forward.1} parent=0 // pred_region
    _
  $region53: #{tactile_decoder_forward.1} parent=0 // pred_fallthru
    _

</llo_original>
